<compile_context>
chip_gen: v5e
topology: v5e:2x2
jax: 0.10.0
libtpu: 0.0.40
codegen_flags: <defaults>
</compile_context>

<pallas_src>
import jax
import jax.numpy as jnp
from jax.experimental import pallas as pl
from jax.experimental.pallas import tpu as pltpu


HIDDEN = 128
LANE = 128


def _round_up(x, m):
    return ((x + m - 1) // m) * m


def _actor_kernel(x_ref, w1_ref, b1_ref, w2_ref, b2_ref, out_ref):
    x = x_ref[...]                                               # (TB, S) f32

    # fc1 + ReLU  (MXU matmul, f32 accumulate)
    h = jnp.dot(x, w1_ref[...], preferred_element_type=jnp.float32)
    h = jnp.maximum(h + b1_ref[...], 0.0)                        # (TB, 128)

    # fc2 -> padded logits (padded columns carry a -1e30 bias)
    logits = jnp.dot(h, w2_ref[...], preferred_element_type=jnp.float32)
    logits = logits + b2_ref[...]                                # (TB, 128)

    # numerically-stable softmax over the (padded) action axis
    m = jnp.max(logits, axis=-1, keepdims=True)
    e = jnp.exp(logits - m)                                      # padded cols -> 0
    denom = jnp.sum(e, axis=-1, keepdims=True)
    inv = pl.reciprocal(denom, approx=True)                      # EUP, not VPU divide
    out_ref[...] = (e * inv).astype(out_ref.dtype)


def actor_discrete_forward(x, w1, b1, w2, b2, *, tb=None):
    """x: (B, state_size) f32 -> action probs (B, action_size) f32."""
    B, S = x.shape
    H = w1.shape[1]
    A = w2.shape[1]
    A_pad = max(_round_up(A, LANE), LANE)

    # Lane-pad fc2: zero weight columns, -1e30 bias so padded logits vanish
    # in the softmax (exp underflows to exactly 0).
    w2_p = jnp.zeros((H, A_pad), jnp.float32).at[:, :A].set(w2.astype(jnp.float32))
    b2_p = jnp.full((1, A_pad), -1e30, jnp.float32).at[0, :A].set(b2.astype(jnp.float32))
    b1_2d = b1.reshape(1, H).astype(jnp.float32)

    # Batch tile: multiple of 8 sublanes, up to 256 (MXU-friendly on v6e/v7x,
    # a few hundred KiB of VMEM regardless of B).
    if tb is None:
        tb = min(256, _round_up(B, 8))
    grid = (pl.cdiv(B, tb),)

    cost = pl.CostEstimate(
        flops=2 * B * (S * H + H * A_pad),
        transcendentals=B * (A_pad + 1),                 # exp + reciprocal
        bytes_accessed=4 * (B * S + S * H + H + H * A_pad + A_pad + B * A_pad),
    )

    out_p = pl.pallas_call(
        _actor_kernel,
        out_shape=jax.ShapeDtypeStruct((B, A_pad), jnp.float32),
        grid=grid,
        in_specs=[
            pl.BlockSpec((tb, S), lambda i: (i, 0)),       # x: tiled over batch
            pl.BlockSpec((S, H), lambda i: (0, 0)),        # w1: resident
            pl.BlockSpec((1, H), lambda i: (0, 0)),        # b1: resident
            pl.BlockSpec((H, A_pad), lambda i: (0, 0)),    # w2 (padded): resident
            pl.BlockSpec((1, A_pad), lambda i: (0, 0)),    # b2 (padded): resident
        ],
        out_specs=pl.BlockSpec((tb, A_pad), lambda i: (i, 0)),
        compiler_params=pltpu.CompilerParams(
            dimension_semantics=("parallel",),             # megacore on v7x
        ),
        cost_estimate=cost,
    )(x.astype(jnp.float32), w1.astype(jnp.float32), b1_2d, w2_p, b2_p)

    return out_p[:, :A]


def init_params(key, state_size, action_size):
    """Deterministic init mimicking nn.Linear's default U(-1/sqrt(fan_in), 1/sqrt(fan_in))."""
    k1, k2, k3, k4 = jax.random.split(key, 4)
    bound1 = 1.0 / jnp.sqrt(jnp.float32(state_size))
    bound2 = 1.0 / jnp.sqrt(jnp.float32(HIDDEN))
    # Stored as (in, out) so the kernel computes x @ W (equivalent to PyTorch x @ W.T).
    w1 = jax.random.uniform(k1, (state_size, HIDDEN), jnp.float32, -bound1, bound1)
    b1 = jax.random.uniform(k2, (HIDDEN,), jnp.float32, -bound1, bound1)
    w2 = jax.random.uniform(k3, (HIDDEN, action_size), jnp.float32, -bound2, bound2)
    b2 = jax.random.uniform(k4, (action_size,), jnp.float32, -bound2, bound2)
    return w1, b1, w2, b2


def _reference(x, w1, b1, w2, b2):
    h = jnp.maximum(x @ w1 + b1, 0.0)
    return jax.nn.softmax(h @ w2 + b2, axis=1)


if __name__ == "__main__":
    key = jax.random.PRNGKey(0)
    batch, state_size, action_size = 2, 16, 4

    kx, kp, kx2 = jax.random.split(key, 3)
    x = jax.random.normal(kx, (batch, state_size), jnp.float32)
    w1, b1, w2, b2 = init_params(kp, state_size, action_size)

    probs = actor_discrete_forward(x, w1, b1, w2, b2)
    probs = jax.block_until_ready(probs)

    probs_ref = _reference(x, w1, b1, w2, b2)
    assert probs.shape == (batch, action_size)
    assert jnp.allclose(probs, probs_ref, atol=2e-3, rtol=2e-3), "mismatch vs reference"
    assert jnp.allclose(jnp.sum(probs, axis=1), 1.0, atol=2e-3), "rows must sum to 1"

    # Exercise the tiled path (multiple grid steps + partial edge block).
    xb = jax.random.normal(kx2, (700, state_size), jnp.float32)
    probs_b = jax.block_until_ready(actor_discrete_forward(xb, w1, b1, w2, b2))
    probs_b_ref = _reference(xb, w1, b1, w2, b2)
    assert probs_b.shape == (700, action_size)
    assert jnp.allclose(probs_b, probs_b_ref, atol=2e-3, rtol=2e-3), "tiled mismatch"

    print("KERNEL_OK")
</pallas_src>

<mosaic_0001>
module attributes {stable_mosaic.version = 11 : i64} {
  func.func @_actor_kernel(%arg0: i32, %arg1: memref<8x16xf32, #tpu.memory_space<vmem>>, %arg2: memref<16x128xf32, #tpu.memory_space<vmem>>, %arg3: memref<1x128xf32, #tpu.memory_space<vmem>>, %arg4: memref<128x128xf32, #tpu.memory_space<vmem>>, %arg5: memref<1x128xf32, #tpu.memory_space<vmem>>, %arg6: memref<8x128xf32, #tpu.memory_space<vmem>>) attributes {dimension_semantics = [#tpu.dimension_semantics<parallel>], iteration_bounds = array<i64: 1>, scalar_prefetch = 0 : i64, scratch_operands = 0 : i64, tpu.core_type = #tpu.core_type<tc>, window_params = [{transform_indices = @transform_0, window_bounds = array<i64: 8, 16>}, {pipeline_mode = #tpu.pipeline_mode<synchronous>, transform_indices = @transform_1, window_bounds = array<i64: 16, 128>}, {pipeline_mode = #tpu.pipeline_mode<synchronous>, transform_indices = @transform_2, window_bounds = array<i64: 1, 128>}, {pipeline_mode = #tpu.pipeline_mode<synchronous>, transform_indices = @transform_3, window_bounds = array<i64: 128, 128>}, {pipeline_mode = #tpu.pipeline_mode<synchronous>, transform_indices = @transform_4, window_bounds = array<i64: 1, 128>}, {transform_indices = @transform_5, window_bounds = array<i64: 8, 128>}]} {
    %c0 = arith.constant 0 : index
    %c0_0 = arith.constant 0 : index
    %0 = vector.load %arg1[%c0, %c0_0] : memref<8x16xf32, #tpu.memory_space<vmem>>, vector<8x16xf32>
    %c0_1 = arith.constant 0 : index
    %c0_2 = arith.constant 0 : index
    %1 = vector.load %arg2[%c0_1, %c0_2] : memref<16x128xf32, #tpu.memory_space<vmem>>, vector<16x128xf32>
    %cst = arith.constant dense<0.000000e+00> : vector<8x128xf32>
    %2 = tpu.matmul %0, %1, %cst {dimension_numbers = #tpu.dot_dimension_numbers<[1], [0], [0], [1], [0, 0, 1, 1], [], []>} : vector<8x16xf32>, vector<16x128xf32>, vector<8x128xf32> -> vector<8x128xf32>
    %c0_3 = arith.constant 0 : index
    %c0_4 = arith.constant 0 : index
    %3 = vector.load %arg3[%c0_3, %c0_4] : memref<1x128xf32, #tpu.memory_space<vmem>>, vector<1x128xf32>
    %4 = vector.broadcast %3 : vector<1x128xf32> to vector<8x128xf32>
    %5 = arith.addf %2, %4 : vector<8x128xf32>
    %cst_5 = arith.constant 0.000000e+00 : f32
    %6 = vector.broadcast %cst_5 : f32 to vector<8x128xf32>
    %7 = arith.maximumf %5, %6 : vector<8x128xf32>
    %c0_6 = arith.constant 0 : index
    %c0_7 = arith.constant 0 : index
    %8 = vector.load %arg4[%c0_6, %c0_7] : memref<128x128xf32, #tpu.memory_space<vmem>>, vector<128x128xf32>
    %cst_8 = arith.constant dense<0.000000e+00> : vector<8x128xf32>
    %9 = tpu.matmul %7, %8, %cst_8 {dimension_numbers = #tpu.dot_dimension_numbers<[1], [0], [0], [1], [0, 0, 1, 1], [], []>} : vector<8x128xf32>, vector<128x128xf32>, vector<8x128xf32> -> vector<8x128xf32>
    %c0_9 = arith.constant 0 : index
    %c0_10 = arith.constant 0 : index
    %10 = vector.load %arg5[%c0_9, %c0_10] : memref<1x128xf32, #tpu.memory_space<vmem>>, vector<1x128xf32>
    %11 = vector.broadcast %10 : vector<1x128xf32> to vector<8x128xf32>
    %12 = arith.addf %9, %11 : vector<8x128xf32>
    %cst_11 = arith.constant dense<0xFF800000> : vector<8xf32>
    %13 = vector.multi_reduction <maximumf>, %12, %cst_11 [1] : vector<8x128xf32> to vector<8xf32>
    %14 = vector.shape_cast %13 : vector<8xf32> to vector<8x1xf32>
    %15 = vector.broadcast %14 : vector<8x1xf32> to vector<8x128xf32>
    %16 = arith.subf %12, %15 : vector<8x128xf32>
    %17 = math.exp %16 : vector<8x128xf32>
    %cst_12 = arith.constant dense<0.000000e+00> : vector<8xf32>
    %18 = vector.multi_reduction <add>, %17, %cst_12 [1] : vector<8x128xf32> to vector<8xf32>
    %19 = vector.shape_cast %18 : vector<8xf32> to vector<8x1xf32>
    %20 = tpu.reciprocal %19 {approx = true} : vector<8x1xf32> -> vector<8x1xf32>
    %21 = vector.broadcast %20 : vector<8x1xf32> to vector<8x128xf32>
    %22 = arith.mulf %17, %21 : vector<8x128xf32>
    %c0_13 = arith.constant 0 : index
    %c0_14 = arith.constant 0 : index
    %23 = vector.load %arg6[%c0_13, %c0_14] : memref<8x128xf32, #tpu.memory_space<vmem>>, vector<8x128xf32>
    tpu.vector_store %arg6[%c0_13, %c0_14], %22 {strides = array<i32>} : memref<8x128xf32, #tpu.memory_space<vmem>>, vector<8x128xf32>,
    return
  }
  func.func @transform_0(%arg0: i32) -> (i32, i32) {
    %c0_i32 = arith.constant 0 : i32
    %c0_i32_0 = arith.constant 0 : i32
    return %arg0, %c0_i32 : i32, i32
  }
  func.func @transform_1(%arg0: i32) -> (i32, i32) {
    %c0_i32 = arith.constant 0 : i32
    %c0_i32_0 = arith.constant 0 : i32
    %c0_i32_1 = arith.constant 0 : i32
    return %c0_i32, %c0_i32_0 : i32, i32
  }
  func.func @transform_2(%arg0: i32) -> (i32, i32) {
    %c0_i32 = arith.constant 0 : i32
    %c0_i32_0 = arith.constant 0 : i32
    %c0_i32_1 = arith.constant 0 : i32
    return %c0_i32, %c0_i32_0 : i32, i32
  }
  func.func @transform_3(%arg0: i32) -> (i32, i32) {
    %c0_i32 = arith.constant 0 : i32
    %c0_i32_0 = arith.constant 0 : i32
    %c0_i32_1 = arith.constant 0 : i32
    return %c0_i32, %c0_i32_0 : i32, i32
  }
  func.func @transform_4(%arg0: i32) -> (i32, i32) {
    %c0_i32 = arith.constant 0 : i32
    %c0_i32_0 = arith.constant 0 : i32
    %c0_i32_1 = arith.constant 0 : i32
    return %c0_i32, %c0_i32_0 : i32, i32
  }
  func.func @transform_5(%arg0: i32) -> (i32, i32) {
    %c0_i32 = arith.constant 0 : i32
    %c0_i32_0 = arith.constant 0 : i32
    return %arg0, %c0_i32 : i32, i32
  }
}

</mosaic_0001>

<llo_original>
// kernel: tpu_custom_call.1
$region0: #{tpu_custom_call.1}
  #allocation0 [shape = 'u32[]', space=smem, size = 0x4, offset = 0x4, fixed_abs, tag = 'smem constant byte address 0x4 - core index']
  #allocation1 [shape = 'u32[72,128]{1,0:T(1,128)}', space=vmem, size = 0x9000, scoped, tag = 'internal scratch']
  %s0 = inlined_call_operand.hbm [shape: f32[2,16], index: 0, kind: input, shape index: {}]
  %s1 = inlined_call_operand.hbm [shape: f32[16,128], index: 1, kind: input, shape index: {}]
  %s2 = inlined_call_operand.vmem [shape: f32[1,128], index: 2, kind: input, shape index: {}]
  %s3 = inlined_call_operand.hbm [shape: f32[128,128], index: 3, kind: input, shape index: {}]
  %s4 = inlined_call_operand.vmem [shape: f32[1,128], index: 4, kind: input, shape index: {}]
  %s5 = inlined_call_operand.hbm [shape: f32[2,128], index: 5, kind: output, shape index: {}]
  %s6 = sld [smem:[#allocation0]]
  $region42: #{tpu_custom_call.1} parent=0
    _
  %s8 = ssub.s32 1, %s6
  %s9 = scalar_select 0, %s8, %s6
  $region1: #{tpu_custom_call.1} parent=0
    #allocation2 [shape = 'u8[4096]{0}', space=vmem, size = 0x1000, scoped, tag = 'input window, operand 0, single buffered']
    #allocation3 [shape = 's32[1]{0}', space=sflag, size = 0x4, scoped, tag = 'scoped memory for tpu_custom_call.1']
    #allocation4 [shape = 's32[1]{0}', space=sflag, size = 0x4, scoped, tag = 'scoped memory for tpu_custom_call.1']
    #allocation5 [shape = 'u8[8192]{0}', space=vmem, size = 0x2000, scoped, tag = 'input window, operand 1, single buffered']
    #allocation6 [shape = 's32[1]{0}', space=sflag, size = 0x4, scoped, tag = 'scoped memory for tpu_custom_call.1']
    #allocation7 [shape = 'u8[65536]{0}', space=vmem, size = 0x10000, scoped, tag = 'input window, operand 3, single buffered']
    #allocation8 [shape = 'u8[4096]{0}', space=vmem, size = 0x1000, scoped, tag = 'output window, operand 0, single buffered']
    %10 = vsyncpa [#allocation3], 0
    %11 = vsyncpa [#allocation6], 0
    %12 = vsyncpa [#allocation4], 0
    // Predicated region
    $region2: #{tpu_custom_call.1} parent=1 // pred_check
      _
    $region3: #{tpu_custom_call.1} parent=1 // pred_check_branch
      %14 = sbr.rel (0) target = $region5
    $region4: #{tpu_custom_call.1} parent=1 // pred_region
      %16 = vsyncadd [#allocation3], 96
      %s17 = sshll.u32 %s0, 4
      %s18 = int_to_ptr.hbm [resolvable:$true] %s17
      %s19 = sshll.u32 [#allocation2], 4
      %s20 = int_to_ptr.vmem [resolvable:$true] %s19
      %25 = dma.hbm_to_vmem [thread:$0]  %s18, 32, %s20, [#allocation3], 32, 32, 2
    $region5: #{tpu_custom_call.1} parent=1 // pred_fallthru
      _
    // Predicated region
    $region6: #{tpu_custom_call.1} parent=1 // pred_check
      _
    $region7: #{tpu_custom_call.1} parent=1 // pred_check_branch
      %27 = sbr.rel (0) target = $region9
    $region8: #{tpu_custom_call.1} parent=1 // pred_region
      %29 = vsyncadd [#allocation6], 0
      %s30 = sshll.u32 %s1, 4
      %s31 = int_to_ptr.hbm [resolvable:$true] %s30
      %s32 = sshll.u32 [#allocation5], 4
      %s33 = int_to_ptr.vmem [resolvable:$true] %s32
      %38 = dma.hbm_to_vmem [thread:$0]  %s31, 256, %s33, [#allocation6], 128, 128, 8
    $region9: #{tpu_custom_call.1} parent=1 // pred_fallthru
      _
    // Predicated region
    $region10: #{tpu_custom_call.1} parent=1 // pred_check
      _
    $region11: #{tpu_custom_call.1} parent=1 // pred_check_branch
      %40 = sbr.rel (0) target = $region13
    $region12: #{tpu_custom_call.1} parent=1 // pred_region
      _
    $region13: #{tpu_custom_call.1} parent=1 // pred_fallthru
      _
    // Predicated region
    $region14: #{tpu_custom_call.1} parent=1 // pred_check
      _
    $region15: #{tpu_custom_call.1} parent=1 // pred_check_branch
      %42 = sbr.rel (0) target = $region17
    $region16: #{tpu_custom_call.1} parent=1 // pred_region
      %44 = vsyncadd [#allocation6], 0
      %s45 = sshll.u32 %s3, 4
      %s46 = int_to_ptr.hbm [resolvable:$true] %s45
      %s47 = sshll.u32 [#allocation7], 4
      %s48 = int_to_ptr.vmem [resolvable:$true] %s47
      %53 = dma.hbm_to_vmem [thread:$0]  %s46, 2048, %s48, [#allocation6], 128, 128, 8
    $region17: #{tpu_custom_call.1} parent=1 // pred_fallthru
      _
    // Predicated region
    $region18: #{tpu_custom_call.1} parent=1 // pred_check
      _
    $region19: #{tpu_custom_call.1} parent=1 // pred_check_branch
      %55 = sbr.rel (0) target = $region21
    $region20: #{tpu_custom_call.1} parent=1 // pred_region
      _
    $region21: #{tpu_custom_call.1} parent=1 // pred_fallthru
      _
    // Predicated region
    $region22: #{tpu_custom_call.1} parent=1 // pred_check
      _
    $region23: #{tpu_custom_call.1} parent=1 // pred_check_branch
      %57 = sbr.rel (0) target = $region25
    $region24: #{tpu_custom_call.1} parent=1 // pred_region
      %59 = dma.done [#allocation3], 128
    $region25: #{tpu_custom_call.1} parent=1 // pred_fallthru
      _
    // Predicated region
    $region26: #{tpu_custom_call.1} parent=1 // pred_check
      _
    $region27: #{tpu_custom_call.1} parent=1 // pred_check_branch
      %61 = sbr.rel (0) target = $region29
    $region28: #{tpu_custom_call.1} parent=1 // pred_region
      %63 = dma.done [#allocation6], 256
    $region29: #{tpu_custom_call.1} parent=1 // pred_fallthru
      _
    // Predicated region
    $region30: #{tpu_custom_call.1} parent=1 // pred_check
      _
    $region31: #{tpu_custom_call.1} parent=1 // pred_check_branch
      %65 = sbr.rel (0) target = $region33
    $region32: #{tpu_custom_call.1} parent=1 // pred_region
      %67 = dma.done [#allocation6], 2048
    $region33: #{tpu_custom_call.1} parent=1 // pred_fallthru
      _
    %v68 = vld [vmem:[#allocation2] sm:$0xff]
    %v69 = vld [vmem:[#allocation5] sm:$0xff]
    %v70 = vld [vmem:[#allocation5 + $0x8] sm:$0xff]
    %v71 = vld [vmem:[%s2] sm:$0x1]
    %v73 = vperm.slane %v71, 0
    %vm75 = vcmask 130048
    %v77 = vsel %vm75, %v68, 0
    %79 = vmatpush.msra.mxu0 0.0
    %80 = vmatpush.msra.mxu0 0.0
    %81 = vmatpush.msra.mxu0 0.0
    %82 = vmatpush.msra.mxu0 0.0
    %83 = vmatpush.msra.mxu0 0.0
    %84 = vmatpush.msra.mxu0 0.0
    %85 = vmatpush.msra.mxu0 0.0
    %86 = vmatpush.msra.mxu0 0.0
    %87 = vmatpush.msra.mxu0 0.0
    %88 = vmatpush.msra.mxu0 0.0
    %89 = vmatpush.msra.mxu0 0.0
    %90 = vmatpush.msra.mxu0 0.0
    %91 = vmatpush.msra.mxu0 0.0
    %92 = vmatpush.msra.mxu0 0.0
    %93 = vmatpush.msra.mxu0 %v70
    %94 = vmatpush.msra.mxu0 %v69
    %95 = vmatmul.f32.gmra.mxu0 %v77
    %v96 = vpop.f32.mrf.mxu0
    %v97 = vadd.f32 %v73, %v96
    %98 = vdwg.mxu0
    %v99 = vmax.f32 %v97, 0.0
    %v100 = vld [vmem:[#allocation7] sm:$0xff]
    %v101 = vld [vmem:[#allocation7 + $0x8] sm:$0xff]
    %v102 = vld [vmem:[#allocation7 + $0x10] sm:$0xff]
    %v103 = vld [vmem:[#allocation7 + $0x18] sm:$0xff]
    %v104 = vld [vmem:[#allocation7 + $0x20] sm:$0xff]
    %v105 = vld [vmem:[#allocation7 + $0x28] sm:$0xff]
    %v106 = vld [vmem:[#allocation7 + $0x30] sm:$0xff]
    %v107 = vld [vmem:[#allocation7 + $0x38] sm:$0xff]
    %v108 = vld [vmem:[#allocation7 + $0x40] sm:$0xff]
    %v109 = vld [vmem:[#allocation7 + $0x48] sm:$0xff]
    %v110 = vld [vmem:[#allocation7 + $0x50] sm:$0xff]
    %v111 = vld [vmem:[#allocation7 + $0x58] sm:$0xff]
    %v112 = vld [vmem:[#allocation7 + $0x60] sm:$0xff]
    %v113 = vld [vmem:[#allocation7 + $0x68] sm:$0xff]
    %v114 = vld [vmem:[#allocation7 + $0x70] sm:$0xff]
    %v115 = vld [vmem:[#allocation7 + $0x78] sm:$0xff]
    %v116 = vld [vmem:[%s4] sm:$0x1]
    %v118 = vperm.slane %v116, 0
    %120 = vmatpush.msra.mxu0 %v115
    %121 = vmatpush.msra.mxu0 %v114
    %122 = vmatpush.msra.mxu0 %v113
    %123 = vmatpush.msra.mxu0 %v112
    %124 = vmatpush.msra.mxu0 %v111
    %125 = vmatpush.msra.mxu0 %v110
    %126 = vmatpush.msra.mxu0 %v109
    %127 = vmatpush.msra.mxu0 %v108
    %128 = vmatpush.msra.mxu0 %v107
    %129 = vmatpush.msra.mxu0 %v106
    %130 = vmatpush.msra.mxu0 %v105
    %131 = vmatpush.msra.mxu0 %v104
    %132 = vmatpush.msra.mxu0 %v103
    %133 = vmatpush.msra.mxu0 %v102
    %134 = vmatpush.msra.mxu0 %v101
    %135 = vmatpush.msra.mxu0 %v100
    %136 = vmatmul.f32.gmra.mxu0 %v99
    %v137 = vpop.f32.mrf.mxu0
    %v138 = vadd.f32 %v118, %v137
    %139 = vdwg.mxu0
    %140 = vmax.xlane.f32.xlu0 %v138
    %v141 = vpop.xlane.xlu0 %140
    %v142 = vsub.f32 %v138, %v141
    %v143 = vmul.f32 %v142, 1.442695
    %v144 = vpow.pop %v143
    %145 = vadd.xlane.f32.xlu0 %v144
    %v146 = vpop.xlane.xlu0 %145
    %v147 = vrcp.pop %v146
    %v148 = vmul.f32 %v144, %v147
    %149 = vst [vmem:[#allocation8] sm:$0xff] %v148
    // Predicated region
    $region34: #{tpu_custom_call.1} parent=1 // pred_check
      _
    $region35: #{tpu_custom_call.1} parent=1 // pred_check_branch
      %151 = sbr.rel (0) target = $region37
    $region36: #{tpu_custom_call.1} parent=1 // pred_region
      %153 = vsyncadd [#allocation4], 96
      %s154 = sshll.u32 [#allocation8], 4
      %s155 = int_to_ptr.vmem [resolvable:$true] %s154
      %s156 = sshll.u32 %s5, 4
      %s157 = int_to_ptr.hbm [resolvable:$true] %s156
      %162 = dma.vmem_to_hbm [thread:$0]  %s155, 32, %s157, [#allocation4], 32, 32, 2
    $region37: #{tpu_custom_call.1} parent=1 // pred_fallthru
      _
    // Predicated region
    $region38: #{tpu_custom_call.1} parent=1 // pred_check
      _
    $region39: #{tpu_custom_call.1} parent=1 // pred_check_branch
      %164 = sbr.rel (0) target = $region41
    $region40: #{tpu_custom_call.1} parent=1 // pred_region
      %166 = dma.done [#allocation4], 128
    $region41: #{tpu_custom_call.1} parent=1 // pred_fallthru
      _
    %167 = vsyncpa [#allocation3], 1
    %168 = vsyncpa [#allocation6], 1
    %169 = vsyncpa [#allocation4], 1

</llo_original>
